<compile_context>
chip_gen: v5e
topology: v5e:2x2
jax: 0.10.0
libtpu: 0.0.40
codegen_flags: <defaults>
</compile_context>

<pallas_src>
import functools

import jax
import jax.numpy as jnp
from jax.experimental import pallas as pl
from jax.experimental.pallas import tpu as pltpu


def _round_up(x, m):
    return ((x + m - 1) // m) * m


def _divisor_tile(total, align, max_elems):
    """Largest t <= max_elems with t % align == 0 and total % t == 0.

    The wrapper pads `total` to a multiple of `align`, so t == align always
    exists as a fallback (no full-extent blowups).
    """
    if total <= max_elems:
        return total
    t = (min(max_elems, total) // align) * align
    while t > align:
        if total % t == 0:
            return t
        t -= align
    return align


def _vmem_capacity_bytes():
    """Per-core VMEM capacity; conservative default if the query fails."""
    try:
        cap = getattr(pltpu.get_tpu_info(), "vmem_capacity_bytes", None)
        if cap:
            return int(cap)
    except Exception:
        pass
    return 64 << 20  # v7x per-TensorCore VMEM (smallest current generation)


# --------------------------- kernels ---------------------------------------


def _fused_kernel(x_ref, w1t_ref, b1_ref, w2t_ref, b2_ref, o_ref, *, inv_s):
    # x resident in VMEM: squeeze -> excitation MLP -> scale in one pass.
    squeeze = jnp.sum(x_ref[...].astype(jnp.float32), axis=-1) * inv_s   # (B, C)
    h = jnp.dot(squeeze, w1t_ref[...],
                preferred_element_type=jnp.float32) + b1_ref[...]
    h = jnp.maximum(h, 0.0)                                              # (B, C_red)
    g = jnp.dot(h, w2t_ref[...],
                preferred_element_type=jnp.float32) + b2_ref[...]
    g = jax.nn.sigmoid(g)                                                # (B, C)
    o_ref[...] = (x_ref[...].astype(jnp.float32) * g[:, :, None]).astype(o_ref.dtype)


def _mean_kernel(x_ref, m_ref, acc_ref, *, inv_s, n_groups):
    s = pl.program_id(1)

    @pl.when(s == 0)
    def _():
        acc_ref[...] = jnp.zeros_like(acc_ref)

    # Lane-wide partial sum: VPU adds over static 128-lane column groups of
    # the (tRg, tSg) block (f32 accumulation even for low-precision x); the
    # only cross-lane (XLU) reduce is in the finalize below.
    partial = x_ref[:, 0:128].astype(jnp.float32)
    for g in range(1, n_groups):
        partial = partial + x_ref[:, 128 * g:128 * (g + 1)].astype(jnp.float32)
    acc_ref[...] += partial

    @pl.when(s == pl.num_programs(1) - 1)
    def _():
        m_ref[...] = jnp.sum(acc_ref[...], axis=-1, keepdims=True) * inv_s


def _scale_kernel(x_ref, g_ref, o_ref):
    # x_ref: (tR, tS); g_ref: (tR, 1) -> broadcast over the lane (spatial) axis.
    o_ref[...] = (x_ref[...].astype(jnp.float32) * g_ref[...]).astype(o_ref.dtype)


# --------------------------- wrapper ----------------------------------------


def channel_se_3d(x, w1, b1, w2, b2, *, force_two_pass=False, donate_x=False):
    """ChannelSELayer3D forward. x: (B, C, D, H, W); w1: (C_red, C); w2: (C, C_red)."""
    B, C, D, H, W = x.shape
    S = D * H * W
    R = B * C
    C_red = w1.shape[0]
    esize = jnp.dtype(x.dtype).itemsize
    inv_s = float(1.0 / S)

    vmem_cap = _vmem_capacity_bytes()
    vmem_limit = int(min(max(8 << 20, int(0.55 * vmem_cap)), 100 << 20))
    blk_budget = max(1 << 20, vmem_cap // 16)   # ~4 MiB/block on v7x, ~8 MiB on v5e/v6e

    x3 = x.reshape(B, C, S)
    w1t = w1.T                       # (C, C_red) — transpose once in XLA, not per step
    w2t = w2.T                       # (C_red, C)
    b1_2d = b1.reshape(1, C_red)
    b2_2d = b2.reshape(1, C)

    # ---------------- Fused single-pass fast path (x resident in VMEM) --------
    x_bytes = R * S * esize
    if (not force_two_pass) and (4 * x_bytes + (4 << 20) <= vmem_limit):
        out3 = pl.pallas_call(
            functools.partial(_fused_kernel, inv_s=inv_s),
            out_shape=jax.ShapeDtypeStruct((B, C, S), x.dtype),
            grid_spec=pltpu.PrefetchScalarGridSpec(
                num_scalar_prefetch=0,
                grid=(1,),
                in_specs=[
                    pl.BlockSpec((B, C, S), lambda i: (0, 0, 0)),
                    pl.BlockSpec((C, C_red), lambda i: (0, 0)),
                    pl.BlockSpec((1, C_red), lambda i: (0, 0)),
                    pl.BlockSpec((C_red, C), lambda i: (0, 0)),
                    pl.BlockSpec((1, C), lambda i: (0, 0)),
                ],
                out_specs=pl.BlockSpec((B, C, S), lambda i: (0, 0, 0)),
            ),
            compiler_params=pltpu.CompilerParams(
                dimension_semantics=("arbitrary",),
                vmem_limit_bytes=vmem_limit,
            ),
        )(x3, w1t, b1_2d, w2t, b2_2d)
        return out3.reshape(B, C, D, H, W)

    # -------------------------- Two-pass streaming path -----------------------
    # Lane-dense flattened layout; pad to (8, 128)-aligned extents so tiles
    # stay bounded and stores unmasked (zero padding is mean/scale neutral).
    R_pad = _round_up(R, 8)
    S_pad = _round_up(S, 128)
    x_flat = x3.reshape(R, S)
    if R_pad != R or S_pad != S:
        x_flat = jnp.pad(x_flat, ((0, R_pad - R), (0, S_pad - S)))

    # ---- Pass 1: per-row spatial mean (reduction-only kernel; MLP in XLA) ----
    tRg = _divisor_tile(R_pad, 8, 128)
    tSg = _divisor_tile(S_pad, 128,
                        max(128, min(8192, blk_budget // (esize * tRg))))
    n_groups = tSg // 128

    means = pl.pallas_call(
        functools.partial(_mean_kernel, inv_s=inv_s, n_groups=n_groups),
        out_shape=jax.ShapeDtypeStruct((R_pad, 1), jnp.float32),
        grid_spec=pltpu.PrefetchScalarGridSpec(
            num_scalar_prefetch=0,
            grid=(R_pad // tRg, S_pad // tSg),
            in_specs=[pl.BlockSpec((tRg, tSg), lambda r, s: (r, s))],
            out_specs=pl.BlockSpec((tRg, 1), lambda r, s: (r, 0)),
            scratch_shapes=[pltpu.VMEM((tRg, 128), jnp.float32)],
        ),
        compiler_params=pltpu.CompilerParams(
            dimension_semantics=("parallel", "arbitrary"),   # rows across TCs; s = reduce
            vmem_limit_bytes=vmem_limit,
        ),
    )(x_flat)

    # Excitation MLP on the tiny (B, C) means in plain XLA: keeps the four
    # weight/bias buffers out of the pipeline VMEM budget and off the
    # finalize tail of the streaming kernel.
    squeeze = means[:R, 0].reshape(B, C)
    h = jax.nn.relu(jnp.dot(squeeze, w1t, preferred_element_type=jnp.float32) + b1_2d)
    gates = jax.nn.sigmoid(jnp.dot(h, w2t, preferred_element_type=jnp.float32) + b2_2d)
    g_flat = gates.astype(jnp.float32).reshape(R, 1)
    if R_pad != R:
        g_flat = jnp.pad(g_flat, ((0, R_pad - R), (0, 0)))

    # ----------------- Pass 2: lane-dense broadcast-multiply ------------------
    tR = _divisor_tile(R_pad, 8, 512)
    tS = _divisor_tile(S_pad, 128, max(128, blk_budget // (esize * tR)))

    extra = {"input_output_aliases": {0: 0}} if donate_x else {}
    out_flat = pl.pallas_call(
        _scale_kernel,
        out_shape=jax.ShapeDtypeStruct((R_pad, S_pad), x.dtype),
        grid_spec=pltpu.PrefetchScalarGridSpec(
            num_scalar_prefetch=0,
            grid=(R_pad // tR, S_pad // tS),
            in_specs=[
                pl.BlockSpec((tR, tS), lambda r, s: (r, s)),
                pl.BlockSpec((tR, 1), lambda r, s: (r, 0)),
            ],
            out_specs=pl.BlockSpec((tR, tS), lambda r, s: (r, s)),
        ),
        compiler_params=pltpu.CompilerParams(
            dimension_semantics=("parallel", "parallel"),    # shard across TCs on v7x
            vmem_limit_bytes=vmem_limit,
        ),
        **extra,
    )(x_flat, g_flat)

    return out_flat[:R, :S].reshape(B, C, D, H, W)


# --------------------------- reference & test --------------------------------


def _reference(x, w1, b1, w2, b2):
    # Pure-JAX reference mirroring the PyTorch forward.
    B, C = x.shape[0], x.shape[1]
    squeeze = jnp.mean(x, axis=(2, 3, 4))                 # (B, C)
    h = jax.nn.relu(squeeze @ w1.T + b1)                  # (B, C_red)
    g = jax.nn.sigmoid(h @ w2.T + b2)                     # (B, C)
    return x * g.reshape(B, C, 1, 1, 1)


def _make_inputs(key, B, C, D, H, W, reduction_ratio=2):
    C_red = C // reduction_ratio
    kx, k1, k2, k3, k4 = jax.random.split(key, 5)
    x = jax.random.normal(kx, (B, C, D, H, W), dtype=jnp.float32)
    # Deterministic nn.Linear-style init (uniform +-1/sqrt(fan_in)).
    bound1 = 1.0 / float(C) ** 0.5
    w1 = jax.random.uniform(k1, (C_red, C), jnp.float32, -bound1, bound1)
    b1 = jax.random.uniform(k2, (C_red,), jnp.float32, -bound1, bound1)
    bound2 = 1.0 / float(C_red) ** 0.5
    w2 = jax.random.uniform(k3, (C, C_red), jnp.float32, -bound2, bound2)
    b2 = jax.random.uniform(k4, (C,), jnp.float32, -bound2, bound2)
    return x, w1, b1, w2, b2


if __name__ == "__main__":
    key = jax.random.PRNGKey(0)
    k0, k1 = jax.random.split(key)

    # 1) Small, aligned shape -> fused single-pass fast path.
    x, w1, b1, w2, b2 = _make_inputs(k0, B=2, C=4, D=4, H=8, W=8)
    out = jax.block_until_ready(channel_se_3d(x, w1, b1, w2, b2))
    ref = _reference(x, w1, b1, w2, b2)
    assert out.shape == x.shape
    assert jnp.allclose(out, ref, atol=1e-5, rtol=1e-5), "fused path mismatch"

    # 2) Same shape forced through the two-pass streaming path (aligned tiles).
    out2 = jax.block_until_ready(
        channel_se_3d(x, w1, b1, w2, b2, force_two_pass=True))
    assert jnp.allclose(out2, ref, atol=1e-5, rtol=1e-5), "two-pass path mismatch"

    # 3) Unaligned shape (R=4 rows, S=140 not a 128-multiple) -> padded two-pass.
    x3, w13, b13, w23, b23 = _make_inputs(k1, B=1, C=4, D=4, H=5, W=7)
    out3 = jax.block_until_ready(
        channel_se_3d(x3, w13, b13, w23, b23, force_two_pass=True))
    ref3 = _reference(x3, w13, b13, w23, b23)
    assert out3.shape == x3.shape
    assert jnp.allclose(out3, ref3, atol=1e-5, rtol=1e-5), "padded two-pass mismatch"

    print("KERNEL_OK")
</pallas_src>

<mosaic_0001>
module attributes {stable_mosaic.version = 11 : i64} {
  func.func @_fused_kernel(%arg0: i32, %arg1: memref<2x4x256xf32, #tpu.memory_space<vmem>>, %arg2: memref<4x2xf32, #tpu.memory_space<vmem>>, %arg3: memref<1x2xf32, #tpu.memory_space<vmem>>, %arg4: memref<2x4xf32, #tpu.memory_space<vmem>>, %arg5: memref<1x4xf32, #tpu.memory_space<vmem>>, %arg6: memref<2x4x256xf32, #tpu.memory_space<vmem>>) attributes {dimension_semantics = [#tpu.dimension_semantics<arbitrary>], iteration_bounds = array<i64: 1>, scalar_prefetch = 0 : i64, scratch_operands = 0 : i64, tpu.core_type = #tpu.core_type<tc>, window_params = [{pipeline_mode = #tpu.pipeline_mode<synchronous>, transform_indices = @transform_0, window_bounds = array<i64: 2, 4, 256>}, {pipeline_mode = #tpu.pipeline_mode<synchronous>, transform_indices = @transform_1, window_bounds = array<i64: 4, 2>}, {pipeline_mode = #tpu.pipeline_mode<synchronous>, transform_indices = @transform_2, window_bounds = array<i64: 1, 2>}, {pipeline_mode = #tpu.pipeline_mode<synchronous>, transform_indices = @transform_3, window_bounds = array<i64: 2, 4>}, {pipeline_mode = #tpu.pipeline_mode<synchronous>, transform_indices = @transform_4, window_bounds = array<i64: 1, 4>}, {pipeline_mode = #tpu.pipeline_mode<synchronous>, transform_indices = @transform_5, window_bounds = array<i64: 2, 4, 256>}]} {
    %c0 = arith.constant 0 : index
    %c0_0 = arith.constant 0 : index
    %c0_1 = arith.constant 0 : index
    %0 = vector.load %arg1[%c0, %c0_0, %c0_1] : memref<2x4x256xf32, #tpu.memory_space<vmem>>, vector<2x4x256xf32>
    %cst = arith.constant dense<0.000000e+00> : vector<2x4xf32>
    %1 = vector.multi_reduction <add>, %0, %cst [2] : vector<2x4x256xf32> to vector<2x4xf32>
    %cst_2 = arith.constant 3.906250e-03 : f32
    %2 = vector.broadcast %cst_2 : f32 to vector<2x4xf32>
    %3 = arith.mulf %1, %2 : vector<2x4xf32>
    %c0_3 = arith.constant 0 : index
    %c0_4 = arith.constant 0 : index
    %4 = vector.load %arg2[%c0_3, %c0_4] : memref<4x2xf32, #tpu.memory_space<vmem>>, vector<4x2xf32>
    %cst_5 = arith.constant dense<0.000000e+00> : vector<2x2xf32>
    %5 = tpu.matmul %3, %4, %cst_5 {dimension_numbers = #tpu.dot_dimension_numbers<[1], [0], [0], [1], [0, 0, 1, 1], [], []>} : vector<2x4xf32>, vector<4x2xf32>, vector<2x2xf32> -> vector<2x2xf32>
    %c0_6 = arith.constant 0 : index
    %c0_7 = arith.constant 0 : index
    %6 = vector.load %arg3[%c0_6, %c0_7] : memref<1x2xf32, #tpu.memory_space<vmem>>, vector<1x2xf32>
    %7 = vector.broadcast %6 : vector<1x2xf32> to vector<2x2xf32>
    %8 = arith.addf %5, %7 : vector<2x2xf32>
    %cst_8 = arith.constant 0.000000e+00 : f32
    %9 = vector.broadcast %cst_8 : f32 to vector<2x2xf32>
    %10 = arith.maximumf %8, %9 : vector<2x2xf32>
    %c0_9 = arith.constant 0 : index
    %c0_10 = arith.constant 0 : index
    %11 = vector.load %arg4[%c0_9, %c0_10] : memref<2x4xf32, #tpu.memory_space<vmem>>, vector<2x4xf32>
    %cst_11 = arith.constant dense<0.000000e+00> : vector<2x4xf32>
    %12 = tpu.matmul %10, %11, %cst_11 {dimension_numbers = #tpu.dot_dimension_numbers<[1], [0], [0], [1], [0, 0, 1, 1], [], []>} : vector<2x2xf32>, vector<2x4xf32>, vector<2x4xf32> -> vector<2x4xf32>
    %c0_12 = arith.constant 0 : index
    %c0_13 = arith.constant 0 : index
    %13 = vector.load %arg5[%c0_12, %c0_13] : memref<1x4xf32, #tpu.memory_space<vmem>>, vector<1x4xf32>
    %14 = vector.broadcast %13 : vector<1x4xf32> to vector<2x4xf32>
    %15 = arith.addf %12, %14 : vector<2x4xf32>
    %16 = arith.negf %15 : vector<2x4xf32>
    %17 = math.exp %16 : vector<2x4xf32>
    %cst_14 = arith.constant 1.000000e+00 : f32
    %18 = vector.broadcast %cst_14 : f32 to vector<2x4xf32>
    %19 = arith.addf %18, %17 : vector<2x4xf32>
    %20 = arith.divf %18, %19 : vector<2x4xf32>
    %c0_15 = arith.constant 0 : index
    %c0_16 = arith.constant 0 : index
    %c0_17 = arith.constant 0 : index
    %21 = vector.load %arg1[%c0_15, %c0_16, %c0_17] : memref<2x4x256xf32, #tpu.memory_space<vmem>>, vector<2x4x256xf32>
    %22 = vector.shape_cast %20 : vector<2x4xf32> to vector<2x4x1xf32>
    %23 = vector.broadcast %22 : vector<2x4x1xf32> to vector<2x4x256xf32>
    %24 = arith.mulf %21, %23 : vector<2x4x256xf32>
    %c0_18 = arith.constant 0 : index
    %c0_19 = arith.constant 0 : index
    %c0_20 = arith.constant 0 : index
    %25 = vector.load %arg6[%c0_18, %c0_19, %c0_20] : memref<2x4x256xf32, #tpu.memory_space<vmem>>, vector<2x4x256xf32>
    tpu.vector_store %arg6[%c0_18, %c0_19, %c0_20], %24 {strides = array<i32>} : memref<2x4x256xf32, #tpu.memory_space<vmem>>, vector<2x4x256xf32>,
    return
  }
  func.func @transform_0(%arg0: i32) -> (i32, i32, i32) {
    %c0_i32 = arith.constant 0 : i32
    %c0_i32_0 = arith.constant 0 : i32
    %c0_i32_1 = arith.constant 0 : i32
    %c0_i32_2 = arith.constant 0 : i32
    return %c0_i32, %c0_i32_0, %c0_i32_1 : i32, i32, i32
  }
  func.func @transform_1(%arg0: i32) -> (i32, i32) {
    %c0_i32 = arith.constant 0 : i32
    %c0_i32_0 = arith.constant 0 : i32
    %c0_i32_1 = arith.constant 0 : i32
    return %c0_i32, %c0_i32_0 : i32, i32
  }
  func.func @transform_2(%arg0: i32) -> (i32, i32) {
    %c0_i32 = arith.constant 0 : i32
    %c0_i32_0 = arith.constant 0 : i32
    %c0_i32_1 = arith.constant 0 : i32
    return %c0_i32, %c0_i32_0 : i32, i32
  }
  func.func @transform_3(%arg0: i32) -> (i32, i32) {
    %c0_i32 = arith.constant 0 : i32
    %c0_i32_0 = arith.constant 0 : i32
    %c0_i32_1 = arith.constant 0 : i32
    return %c0_i32, %c0_i32_0 : i32, i32
  }
  func.func @transform_4(%arg0: i32) -> (i32, i32) {
    %c0_i32 = arith.constant 0 : i32
    %c0_i32_0 = arith.constant 0 : i32
    %c0_i32_1 = arith.constant 0 : i32
    return %c0_i32, %c0_i32_0 : i32, i32
  }
  func.func @transform_5(%arg0: i32) -> (i32, i32, i32) {
    %c0_i32 = arith.constant 0 : i32
    %c0_i32_0 = arith.constant 0 : i32
    %c0_i32_1 = arith.constant 0 : i32
    %c0_i32_2 = arith.constant 0 : i32
    return %c0_i32, %c0_i32_0, %c0_i32_1 : i32, i32, i32
  }
}

</mosaic_0001>

<llo_original>
// kernel: tpu_custom_call.1
$region0: #{tpu_custom_call.1}
  #allocation0 [shape = 'u32[]', space=smem, size = 0x4, offset = 0x4, fixed_abs, tag = 'smem constant byte address 0x4 - core index']
  #allocation1 [shape = 'u32[72,128]{1,0:T(1,128)}', space=vmem, size = 0x9000, scoped, tag = 'internal scratch']
  %s0 = inlined_call_operand.hbm [shape: f32[2,4,256], index: 0, kind: input, shape index: {}]
  %s1 = inlined_call_operand.vmem [shape: f32[4,2], index: 1, kind: input, shape index: {}]
  %s2 = inlined_call_operand.vmem [shape: f32[1,2], index: 2, kind: input, shape index: {}]
  %s3 = inlined_call_operand.vmem [shape: f32[2,4], index: 3, kind: input, shape index: {}]
  %s4 = inlined_call_operand.vmem [shape: f32[1,4], index: 4, kind: input, shape index: {}]
  %s5 = inlined_call_operand.hbm [shape: f32[2,4,256], index: 5, kind: output, shape index: {}]
  %s6 = sld [smem:[#allocation0]]
  $region34: #{tpu_custom_call.1} parent=0
    _
  %s8 = ssub.s32 1, %s6
  %s9 = scalar_select 0, %s8, %s6
  $region1: #{tpu_custom_call.1} parent=0
    #allocation2 [shape = 'u8[8192]{0}', space=vmem, size = 0x2000, scoped, tag = 'input window, operand 0, single buffered']
    #allocation3 [shape = 's32[1]{0}', space=sflag, size = 0x4, scoped, tag = 'scoped memory for tpu_custom_call.1']
    #allocation4 [shape = 's32[1]{0}', space=sflag, size = 0x4, scoped, tag = 'scoped memory for tpu_custom_call.1']
    #allocation5 [shape = 'u8[8192]{0}', space=vmem, size = 0x2000, scoped, tag = 'output window, operand 0, single buffered']
    %10 = vsyncpa [#allocation3], 0
    %11 = vsyncpa [#allocation4], 0
    // Predicated region
    $region2: #{tpu_custom_call.1} parent=1 // pred_check
      _
    $region3: #{tpu_custom_call.1} parent=1 // pred_check_branch
      %13 = sbr.rel (0) target = $region5
    $region4: #{tpu_custom_call.1} parent=1 // pred_region
      %15 = vsyncadd [#allocation3], 0
      %s16 = sshll.u32 %s0, 4
      %s17 = int_to_ptr.hbm [resolvable:$true] %s16
      %s18 = sshll.u32 [#allocation2], 4
      %s19 = int_to_ptr.vmem [resolvable:$true] %s18
      %24 = dma.hbm_to_vmem [thread:$0]  %s17, 256, %s19, [#allocation3], 128, 128, 8
    $region5: #{tpu_custom_call.1} parent=1 // pred_fallthru
      _
    // Predicated region
    $region6: #{tpu_custom_call.1} parent=1 // pred_check
      _
    $region7: #{tpu_custom_call.1} parent=1 // pred_check_branch
      %26 = sbr.rel (0) target = $region9
    $region8: #{tpu_custom_call.1} parent=1 // pred_region
      _
    $region9: #{tpu_custom_call.1} parent=1 // pred_fallthru
      _
    // Predicated region
    $region10: #{tpu_custom_call.1} parent=1 // pred_check
      _
    $region11: #{tpu_custom_call.1} parent=1 // pred_check_branch
      %28 = sbr.rel (0) target = $region13
    $region12: #{tpu_custom_call.1} parent=1 // pred_region
      _
    $region13: #{tpu_custom_call.1} parent=1 // pred_fallthru
      _
    // Predicated region
    $region14: #{tpu_custom_call.1} parent=1 // pred_check
      _
    $region15: #{tpu_custom_call.1} parent=1 // pred_check_branch
      %30 = sbr.rel (0) target = $region17
    $region16: #{tpu_custom_call.1} parent=1 // pred_region
      _
    $region17: #{tpu_custom_call.1} parent=1 // pred_fallthru
      _
    // Predicated region
    $region18: #{tpu_custom_call.1} parent=1 // pred_check
      _
    $region19: #{tpu_custom_call.1} parent=1 // pred_check_branch
      %32 = sbr.rel (0) target = $region21
    $region20: #{tpu_custom_call.1} parent=1 // pred_region
      _
    $region21: #{tpu_custom_call.1} parent=1 // pred_fallthru
      _
    // Predicated region
    $region22: #{tpu_custom_call.1} parent=1 // pred_check
      _
    $region23: #{tpu_custom_call.1} parent=1 // pred_check_branch
      %34 = sbr.rel (0) target = $region25
    $region24: #{tpu_custom_call.1} parent=1 // pred_region
      %36 = dma.done [#allocation3], 256
    $region25: #{tpu_custom_call.1} parent=1 // pred_fallthru
      _
    %v37 = vld [vmem:[#allocation2] sm:$0xff]
    %v38 = vld [vmem:[#allocation2 + $0x8] sm:$0xff]
    %41 = vst [vmem:[#allocation1] ss:$2 sm:$0xff] %v37
    %v42 = vld.sshfl [vmem:[#allocation1] sm:$0xff pattern:$0x75316420]
    %v43 = vld.sshfl [vmem:[#allocation1 + $0x8] sm:$0xff pattern:$0x75316420]
    %s44 = scalar_lea.vmem [#allocation1], 16
    %45 = vst [vmem:[%s44] ss:$2 sm:$0xff] %v38
    %v46 = vld.sshfl [vmem:[#allocation1 + $0x10] sm:$0xff pattern:$0x75316420]
    %v47 = vld.sshfl [vmem:[#allocation1 + $0x18] sm:$0xff pattern:$0x75316420]
    %vm52 = vcmask 1043456
    %v53 = vsel %vm52, %v42, 0.0
    %v54 = vsel %vm52, %v43, 0.0
    %v55 = vadd.f32 %v53, %v54
    %56 = vadd.xlane.f32.xlu0 %v55
    %v57 = vpop.xlane.xlu0 %56
    %v58 = vsel %vm52, %v46, 0.0
    %v59 = vsel %vm52, %v47, 0.0
    %v60 = vadd.f32 %v58, %v59
    %61 = vadd.xlane.f32.xlu0 %v60
    %v62 = vpop.xlane.xlu0 %61
    %v63 = vmul.f32 %v57, 0.00390625
    %v64 = vmul.f32 %v62, 0.00390625
    %v65 = vld [vmem:[%s1] sm:$0xf]
    %v66 = vld [vmem:[%s2] sm:$0x1]
    %v68 = vperm.slane %v66, 0
    %v72 = vlaneseq
    %v73 = vand.u32 %v72, 127
    %v74 = vperm.slane %v63, %v73
    %v75 = vperm.slane %v64, %v73
    %vm76 = vcmask 1041409
    %v77 = vsel %vm76, %v75, %v74
    %vm78 = vcmask 31744
    %v79 = vsel %vm78, %v77, 0
    %v82 = vsel %vm52, %v65, 0
    %84 = vmatpush.msra.mxu0 0.0
    %85 = vmatpush.msra.mxu0 0.0
    %86 = vmatpush.msra.mxu0 0.0
    %87 = vmatpush.msra.mxu0 0.0
    %88 = vmatpush.msra.mxu0 0.0
    %89 = vmatpush.msra.mxu0 0.0
    %90 = vmatpush.msra.mxu0 0.0
    %91 = vmatpush.msra.mxu0 0.0
    %92 = vmatpush.msra.mxu0 0.0
    %93 = vmatpush.msra.mxu0 0.0
    %94 = vmatpush.msra.mxu0 0.0
    %95 = vmatpush.msra.mxu0 0.0
    %96 = vmatpush.msra.mxu0 0.0
    %97 = vmatpush.msra.mxu0 0.0
    %98 = vmatpush.msra.mxu0 0.0
    %99 = vmatpush.msra.mxu0 %v82
    %100 = vmatmul.f32.gmra.mxu0 %v79
    %v101 = vpop.f32.mrf.mxu0
    %v102 = vadd.f32 %v68, %v101
    %103 = vdwg.mxu0
    %v104 = vmax.f32 %v102, 0.0
    %v105 = vld [vmem:[%s3] sm:$0x3]
    %v106 = vld [vmem:[%s4] sm:$0x1]
    %v108 = vperm.slane %v106, 0
    %vm110 = vcmask 15360
    %v112 = vsel %vm110, %v104, 0
    %vm114 = vcmask 1041408
    %v116 = vsel %vm114, %v105, 0
    %118 = vmatpush.msra.mxu0 0.0
    %119 = vmatpush.msra.mxu0 0.0
    %120 = vmatpush.msra.mxu0 0.0
    %121 = vmatpush.msra.mxu0 0.0
    %122 = vmatpush.msra.mxu0 0.0
    %123 = vmatpush.msra.mxu0 0.0
    %124 = vmatpush.msra.mxu0 0.0
    %125 = vmatpush.msra.mxu0 0.0
    %126 = vmatpush.msra.mxu0 0.0
    %127 = vmatpush.msra.mxu0 0.0
    %128 = vmatpush.msra.mxu0 0.0
    %129 = vmatpush.msra.mxu0 0.0
    %130 = vmatpush.msra.mxu0 0.0
    %131 = vmatpush.msra.mxu0 0.0
    %132 = vmatpush.msra.mxu0 0.0
    %133 = vmatpush.msra.mxu0 %v116
    %134 = vmatmul.f32.gmra.mxu0 %v112
    %v135 = vpop.f32.mrf.mxu0
    %v136 = vadd.f32 %v108, %v135
    %137 = vdwg.mxu0
    %v138 = vxor.u32 %v136, 2147483648
    %v139 = vmul.f32 %v138, 1.442695
    %v140 = vpow.pop %v139
    %v141 = vadd.f32 %v140, 1.0
    %v142 = vrcp.pop %v141
    %v143 = vmul.f32 %v141, %v142
    %v144 = vsub.f32 1.0, %v143
    %v145 = vmul.f32 %v142, %v144
    %v146 = vadd.f32 %v142, %v145
    %vm147 = vweird.f32 %v141
    %vm148 = vweird.f32 %v142
    %vm149 = vmor %vm147, %vm148
    %v150 = vsel %vm149, %v142, %v146
    %v151 = vand.u32 2147483647, %v141
    %vm152 = vcmp.eq.f32.partialorder %v151, 8.507059e+37
    %v153 = vand.u32 %v141, 2147483648
    %v154 = vor.u32 1.1754944e-38, %v153
    %v155 = vsel %vm152, %v154, %v150
    %v156 = vmul.f32 1.0, %v155
    %v157 = vperm.slane %v156, 0
    %v158 = vlaneseq
    %v159 = vshrl.u32 %v158, 7
    %161 = vset.pattern.permute.xlu0 %v159
    %162 = vperm.xlu0 %161, %v157
    %v163 = vpop.permute.xlu0 %162
    %v164 = vperm.slane %v156, 1
    %v165 = vlaneseq
    %v166 = vshrl.u32 %v165, 7
    %168 = vset.pattern.permute.xlu0 %v166
    %169 = vperm.xlu0 %168, %v164
    %v170 = vpop.permute.xlu0 %169
    %v174 = vunpack.c.l.s4 839922192
    %v175 = vunpack.c.0.s8 %v174
    %v176 = vperm.slane %v163, %v175
    %v178 = vunpack.c.l.s4 839922192
    %v179 = vunpack.c.0.s8 %v178
    %v180 = vperm.slane %v170, %v179
    %v183 = vmul.f32 %v37, %v176
    %v184 = vmul.f32 %v38, %v180
    %185 = vst [vmem:[#allocation5] sm:$0xff] %v183
    %186 = vst [vmem:[#allocation5 + $0x8] sm:$0xff] %v184
    // Predicated region
    $region26: #{tpu_custom_call.1} parent=1 // pred_check
      _
    $region27: #{tpu_custom_call.1} parent=1 // pred_check_branch
      %188 = sbr.rel (0) target = $region29
    $region28: #{tpu_custom_call.1} parent=1 // pred_region
      %190 = vsyncadd [#allocation4], 0
      %s191 = sshll.u32 [#allocation5], 4
      %s192 = int_to_ptr.vmem [resolvable:$true] %s191
      %s193 = sshll.u32 %s5, 4
      %s194 = int_to_ptr.hbm [resolvable:$true] %s193
      %199 = dma.vmem_to_hbm [thread:$0]  %s192, 256, %s194, [#allocation4], 128, 128, 8
    $region29: #{tpu_custom_call.1} parent=1 // pred_fallthru
      _
    // Predicated region
    $region30: #{tpu_custom_call.1} parent=1 // pred_check
      _
    $region31: #{tpu_custom_call.1} parent=1 // pred_check_branch
      %201 = sbr.rel (0) target = $region33
    $region32: #{tpu_custom_call.1} parent=1 // pred_region
      %203 = dma.done [#allocation4], 256
    $region33: #{tpu_custom_call.1} parent=1 // pred_fallthru
      _
    %204 = vsyncpa [#allocation3], 1
    %205 = vsyncpa [#allocation4], 1

</llo_original>
